<compile_context>
chip_gen: v7x
topology: tpu7x:2x2x1
jax: 0.10.0
libtpu: 0.0.40
codegen_flags: <defaults>
</compile_context>

<pallas_src>
import math
from functools import partial

import jax
import jax.numpy as jnp
from jax.experimental import pallas as pl
from jax.experimental.pallas import tpu as pltpu

# ---- module config (mirrors PositionalEncoding.__init__) --------------------
D_MODEL = 128          # d_model (multiple of 128 -> lane-dense fast path)
MAX_LEN = 5000         # max_len (PyTorch default)
SEQ_LEN = 8            # x.size(0)
BATCH = 2              # x.size(1)


def make_positional_encoding(d_model: int, max_len: int = 5000,
                             dtype=jnp.float32) -> jnp.ndarray:
    """Builds the `pe` register_buffer, flattened to (max_len, d_model)."""
    position = jnp.arange(max_len, dtype=jnp.float32)[:, None]              # (L, 1)
    div_term = jnp.exp(jnp.arange(0, d_model, 2, dtype=jnp.float32)
                       * (-math.log(10000.0) / d_model))                    # (D/2,)
    angles = position * div_term                                            # (L, D/2)
    pe = jnp.zeros((max_len, d_model), dtype=jnp.float32)
    pe = pe.at[:, 0::2].set(jnp.sin(angles))
    pe = pe.at[:, 1::2].set(jnp.cos(angles))
    return pe.astype(dtype)


def _pos_enc_kernel(x_ref, pe_ref, out_ref):
    # x_ref / out_ref: (ts, B*D) lane-dense slab; pe_ref: (ts, D) or (ts, B*D).
    pe = pe_ref[...]
    reps = x_ref.shape[-1] // pe_ref.shape[-1]           # == batch size (static)
    if reps > 1:
        # Broadcast pe over the batch by tiling along lanes (vreg lane copy);
        # requires D % 128 == 0 (guaranteed by the wrapper's fast path).
        pe = jnp.tile(pe, (1, reps))
    # Single full-width VPU add; per-tile dtype cast is free at mem-bound.
    out_ref[...] = x_ref[...] + pe.astype(x_ref.dtype)


def _choose_seq_tile(S: int, row_bytes: int) -> int:
    """Pick the seq tile: 1 step for small S; big, VMEM-safe, >=2 steps for large S."""
    if S <= 512:
        return S                                   # single step, overhead-dominated
    # Double-buffered VMEM per row ~= 2 * row_bytes.  Budget ~12 MiB so the same
    # config fits v5e (16 MiB scoped default) and v7x (32 MiB default / 64 MiB phys).
    vmem_budget = 12 * 1024 * 1024
    ts = vmem_budget // (2 * row_bytes)
    ts = min(ts, S // 2, 8192)                     # >=2 grid steps -> v7x megacore
    ts = max(8, (ts // 8) * 8)                     # (8, 128) tiling constraint
    return ts


@partial(jax.jit, static_argnames=("alias_out_to_x",))
def positional_encoding(x: jnp.ndarray, pe: jnp.ndarray, *,
                        alias_out_to_x: bool = False) -> jnp.ndarray:
    """x: (S, B, D) seq-first, as in the PyTorch module.  pe: (max_len, D)."""
    S, B, D = x.shape
    max_len, d_model = pe.shape
    assert d_model == D and S <= max_len

    x2 = x.reshape(S, B * D)          # row-major reshape -> lane dim = B*D (free)

    if D % 128 == 0:
        # Fast path: pass un-expanded pe rows; batch broadcast happens in-kernel,
        # so pe's HBM/DMA traffic is NOT multiplied by B.
        pe_rows, pe_lanes = pe, D
    else:
        # Guarded fallback: pre-broadcast to a lane-dense (S, B*D) slab in the
        # wrapper (keeps unmasked stores; costs B x pe traffic only in this case).
        pe_rows, pe_lanes = jnp.tile(pe[:S], (1, B)), B * D

    row_bytes = 2 * B * D * x.dtype.itemsize + pe_lanes * pe.dtype.itemsize
    ts = _choose_seq_tile(S, row_bytes)

    # pe block constraint: ts must be a multiple of 8 OR equal pe's full row count.
    pe_in = pe_rows if (ts % 8 == 0 or ts == pe_rows.shape[0]) else pe_rows[:S]

    grid = (pl.cdiv(S, ts),)
    kwargs = {}
    if alias_out_to_x:
        # Output reuses x2's HBM buffer (input 0). Only beneficial when x is
        # donated; otherwise XLA inserts a defensive copy.
        kwargs["input_output_aliases"] = {0: 0}

    out2 = pl.pallas_call(
        _pos_enc_kernel,
        out_shape=jax.ShapeDtypeStruct((S, B * D), x.dtype),
        grid=grid,
        in_specs=[
            pl.BlockSpec((ts, B * D), lambda i: (i, 0)),     # x slab
            pl.BlockSpec((ts, pe_lanes), lambda i: (i, 0)),  # pe rows (only first
                                                             # ceil(S/ts) blocks DMA'd)
        ],
        out_specs=pl.BlockSpec((ts, B * D), lambda i: (i, 0)),
        compiler_params=pltpu.CompilerParams(
            dimension_semantics=("parallel",)),              # shards seq tiles on v7x
        **kwargs,
    )(x2, pe_in)

    return out2.reshape(S, B, D)


# ---- pure-JAX reference (mirrors the PyTorch forward) ------------------------
def reference(x, pe):
    return x + pe[: x.shape[0]][:, None, :].astype(x.dtype)


if __name__ == "__main__":
    key = jax.random.PRNGKey(0)
    pe = make_positional_encoding(D_MODEL, MAX_LEN)          # __init__-time buffer

    # Small shape from the module spec (single-step path).
    x = jax.random.normal(key, (SEQ_LEN, BATCH, D_MODEL), dtype=jnp.float32)
    out = positional_encoding(x, pe)
    jax.block_until_ready(out)
    ref = reference(x, pe)
    assert out.shape == (SEQ_LEN, BATCH, D_MODEL), out.shape
    assert jnp.allclose(out, ref, atol=1e-6, rtol=1e-6), \
        f"max abs err {float(jnp.max(jnp.abs(out - ref)))}"

    # Longer sequence exercises the multi-step (megacore-shardable) tiled path.
    x_long = jax.random.normal(jax.random.PRNGKey(1), (1024, BATCH, D_MODEL),
                               dtype=jnp.float32)
    out_long = positional_encoding(x_long, pe)
    jax.block_until_ready(out_long)
    assert jnp.allclose(out_long, reference(x_long, pe), atol=1e-6, rtol=1e-6)

    print("KERNEL_OK")
</pallas_src>

<mosaic_0001>
module attributes {stable_mosaic.version = 11 : i64} {
  func.func @_pos_enc_kernel(%arg0: i32, %arg1: memref<8x256xf32, #tpu.memory_space<vmem>>, %arg2: memref<8x128xf32, #tpu.memory_space<vmem>>, %arg3: memref<8x256xf32, #tpu.memory_space<vmem>>) attributes {dimension_semantics = [#tpu.dimension_semantics<parallel>], iteration_bounds = array<i64: 1>, scalar_prefetch = 0 : i64, scratch_operands = 0 : i64, tpu.core_type = #tpu.core_type<tc>, window_params = [{transform_indices = @transform_0, window_bounds = array<i64: 8, 256>}, {transform_indices = @transform_1, window_bounds = array<i64: 8, 128>}, {transform_indices = @transform_2, window_bounds = array<i64: 8, 256>}]} {
    %c0 = arith.constant 0 : index
    %c0_0 = arith.constant 0 : index
    %0 = vector.load %arg2[%c0, %c0_0] : memref<8x128xf32, #tpu.memory_space<vmem>>, vector<8x128xf32>
    %1 = tpu.concatenate %0, %0 in 1 : vector<8x128xf32>, vector<8x128xf32> -> vector<8x256xf32>
    %c0_1 = arith.constant 0 : index
    %c0_2 = arith.constant 0 : index
    %2 = vector.load %arg1[%c0_1, %c0_2] : memref<8x256xf32, #tpu.memory_space<vmem>>, vector<8x256xf32>
    %3 = arith.addf %2, %1 : vector<8x256xf32>
    %c0_3 = arith.constant 0 : index
    %c0_4 = arith.constant 0 : index
    %4 = vector.load %arg3[%c0_3, %c0_4] : memref<8x256xf32, #tpu.memory_space<vmem>>, vector<8x256xf32>
    tpu.vector_store %arg3[%c0_3, %c0_4], %3 {strides = array<i32>} : memref<8x256xf32, #tpu.memory_space<vmem>>, vector<8x256xf32>,
    return
  }
  func.func @transform_0(%arg0: i32) -> (i32, i32) {
    %c0_i32 = arith.constant 0 : i32
    %c0_i32_0 = arith.constant 0 : i32
    return %arg0, %c0_i32 : i32, i32
  }
  func.func @transform_1(%arg0: i32) -> (i32, i32) {
    %c0_i32 = arith.constant 0 : i32
    %c0_i32_0 = arith.constant 0 : i32
    return %arg0, %c0_i32 : i32, i32
  }
  func.func @transform_2(%arg0: i32) -> (i32, i32) {
    %c0_i32 = arith.constant 0 : i32
    %c0_i32_0 = arith.constant 0 : i32
    return %arg0, %c0_i32 : i32, i32
  }
}

</mosaic_0001>

<llo_original>
// kernel: positional_encoding.1
$region0: #{positional_encoding.1}
  #allocation0 [shape = 'u32[]', space=smem, size = 0x4, offset = 0x4, fixed_abs, tag = 'smem constant byte address 0x4 - core index']
  #allocation1 [shape = 'u32[144,128]{1,0:T(1,128)}', space=vmem, size = 0x12000, scoped, tag = 'internal scratch']
  %s0 = inlined_call_operand.vmem [shape: f32[8,256], index: 0, kind: input, shape index: {}]
  %s1 = inlined_call_operand.hbm [shape: f32[5000,128], index: 1, kind: input, shape index: {}]
  %s2 = inlined_call_operand.vmem [shape: f32[8,256], index: 2, kind: output, shape index: {}]
  %s3 = sld [smem:[#allocation0]]
  $region22: #{positional_encoding.1} parent=0
    _
  %s5 = ssub.s32 1, %s3
  %s6 = scalar_select 0, %s5, %s3
  $region1: #{positional_encoding.1} parent=0
    #allocation2 [shape = 'u8[4096]{0}', space=vmem, size = 0x1000, scoped, tag = 'input window, operand 1, single buffered']
    #allocation3 [shape = 's32[1]{0}', space=sflag, size = 0x4, scoped, tag = 'scoped memory for positional_encoding.1']
    %7 = vsyncpa [#allocation3], 0
    // Predicated region
    $region2: #{positional_encoding.1} parent=1 // pred_check
      _
    $region3: #{positional_encoding.1} parent=1 // pred_check_branch
      %9 = sbr.rel (0) target = $region5
    $region4: #{positional_encoding.1} parent=1 // pred_region
      _
    $region5: #{positional_encoding.1} parent=1 // pred_fallthru
      _
    // Predicated region
    $region6: #{positional_encoding.1} parent=1 // pred_check
      _
    $region7: #{positional_encoding.1} parent=1 // pred_check_branch
      %11 = sbr.rel (0) target = $region9
    $region8: #{positional_encoding.1} parent=1 // pred_region
      %s13 = ssub.s32 128, 128
      %14 = vsyncadd [#allocation3], %s13
      %s16 = sshll.u32 [#allocation2], 4
      %s17 = int_to_ptr.vmem [resolvable:$true] %s16
      %19 = dma.hbm_to_vmem [thread:$0]  %s1, 128, %s17, [#allocation3]
    $region9: #{positional_encoding.1} parent=1 // pred_fallthru
      _
    // Predicated region
    $region10: #{positional_encoding.1} parent=1 // pred_check
      _
    $region11: #{positional_encoding.1} parent=1 // pred_check_branch
      %21 = sbr.rel (0) target = $region13
    $region12: #{positional_encoding.1} parent=1 // pred_region
      %22 = dma.done [#allocation3], 128
    $region13: #{positional_encoding.1} parent=1 // pred_fallthru
      _
    %v23 = vld [vmem:[#allocation2] sm:$0xff]
    %v24 = vld [vmem:[%s0] sm:$0xff]
    %v25 = vld [vmem:[%s0 + $0x8] sm:$0xff]
    %v26 = vadd.f32 %v24, %v23
    %v27 = vadd.f32 %v25, %v23
    %28 = vst [vmem:[%s2] sm:$0xff] %v26
    %29 = vst [vmem:[%s2 + $0x8] sm:$0xff] %v27
    // Predicated region
    $region14: #{positional_encoding.1} parent=1 // pred_check
      _
    $region15: #{positional_encoding.1} parent=1 // pred_check_branch
      %31 = sbr.rel (0) target = $region17
    $region16: #{positional_encoding.1} parent=1 // pred_region
      _
    $region17: #{positional_encoding.1} parent=1 // pred_fallthru
      _
    // Predicated region
    $region18: #{positional_encoding.1} parent=1 // pred_check
      _
    $region19: #{positional_encoding.1} parent=1 // pred_check_branch
      %33 = sbr.rel (0) target = $region21
    $region20: #{positional_encoding.1} parent=1 // pred_region
      _
    $region21: #{positional_encoding.1} parent=1 // pred_fallthru
      _
    %34 = vsyncpa [#allocation3], 1

</llo_original>
